<compile_context>
chip_gen: v5e
topology: v5e:2x2
jax: 0.10.0
libtpu: 0.0.40
codegen_flags: <defaults>
</compile_context>

<pallas_src>
import functools

import jax
import jax.numpy as jnp
import numpy as np
from jax.experimental import pallas as pl
from jax.experimental.pallas import tpu as pltpu


# --------------------------------------------------------------------------
# hardware-aware VMEM limit (v5e/v6e: 128 MiB physical, v7x: 64 MiB)
# --------------------------------------------------------------------------
@functools.lru_cache(maxsize=1)
def _vmem_limit_bytes():
    cap = 128 << 20
    try:
        info = pltpu.get_tpu_info()
        cap = int(getattr(info, "vmem_capacity_bytes", cap)) or cap
    except Exception:
        pass
    return int(min((cap * 3) // 4, 96 << 20))


# --------------------------------------------------------------------------
# Pallas kernel: one (Cout-tile, Hout-tile) block of Conv2d((K,1), (stride,1))
# --------------------------------------------------------------------------
def _conv_k1_kernel(x_ref, w_ref, b_ref, o_ref, *, K, stride, cin, ht, leaky, slope):
    """Grid = (cout_tiles, hout_tiles) = (j, i); all refs live in VMEM.

      x_ref: (BP, Hg, stride*Cin)  whole zero-padded, stride-packed input (resident)
      w_ref: (K, Cin, Ct)          Cout tile of the weights (resident per j)
      b_ref: (1, Ct)               Cout tile of the bias (float32)
      o_ref: (BP, Ht, Ct)          output tile: rows [i*Ht, ...), cols [j*Ct, ...)

    Identity used per tap (row-major stride packing):
      Xpad[m, g*stride + r, c] == x_ref[m, g, r*Cin + c]
    so  out[m, ho, :] = bias + sum_k Xpad[m, ho*stride + k, :] @ W[k]
                      = bias + sum_k x_ref[m, ho + k//stride, (k%stride)*Cin:...] @ W[k]
    """
    i = pl.program_id(1)
    bp = x_ref.shape[0]
    ct = o_ref.shape[-1]
    row0 = i * ht
    if ht % 8 == 0:
        row0 = pl.multiple_of(row0, 8)        # aligned sublane window start

    acc = jnp.zeros((bp * ht, ct), dtype=jnp.float32)
    # k-outer / full-M inner: one (BP*Ht, Cin) @ (Cin, Ct) matmul per kernel tap.
    for k in range(K):                        # K is 2 or 5: tiny static unroll
        q, r = divmod(k, stride)
        xk = x_ref[:, pl.ds(row0 + q, ht), pl.ds(r * cin, cin)]
        xk = xk.reshape(bp * ht, cin)
        wk = w_ref[k]                         # (Cin, Ct)
        if cin == 1:
            # rank-1 tap (first layer): VPU broadcast multiply-add, skip the MXU.
            acc = acc + xk.astype(jnp.float32) * wk.astype(jnp.float32)
        else:
            acc = acc + jnp.dot(xk, wk, preferred_element_type=jnp.float32)
    acc = acc + b_ref[...].astype(jnp.float32)
    if leaky:
        acc = jnp.where(acc >= 0.0, acc, slope * acc)
    o_ref[...] = acc.reshape(bp, ht, ct).astype(o_ref.dtype)


def conv2d_k1(x, w, b, *, stride, pad, leaky, slope=0.1,
              compute_dtype=jnp.float32, m_tile=256, c_tile=256):
    """Conv2d with kernel (K,1), stride (stride,1), zero padding `pad` along H.

    x: (BP, H, Cin); w: (K, Cin, Cout); b: (Cout,).  Returns (BP, Hout, Cout).
    """
    BP, H, Cin = x.shape
    K, _, Cout = w.shape
    Hout = (H + 2 * pad - K) // stride + 1
    assert Hout >= 1

    # ---- tile sizes --------------------------------------------------------
    ht = max(8, (m_tile // max(BP, 1)) // 8 * 8)   # output rows per tile (8-aligned)
    if Hout <= ht:
        ht = Hout                                  # single full-dim block along H
    ct = Cout if Cout <= c_tile else c_tile        # output-channel (lane) tile
    n_h = pl.cdiv(Hout, ht)
    n_c = pl.cdiv(Cout, ct)
    qmax = (K - 1) // stride

    # ---- zero pad + pack the stride phase into the lane axis ----------------
    # The reshape below is free at the HBM level (identical row-major layout).
    hg = max(n_h * ht + qmax, pl.cdiv(H + 2 * pad, stride))
    pad_bot = hg * stride - pad - H                # >= pad for this module's configs
    xp = jnp.pad(x.astype(compute_dtype), ((0, 0), (pad, pad_bot), (0, 0)))
    xr = xp.reshape(BP, hg, stride * Cin)

    kernel = functools.partial(_conv_k1_kernel, K=K, stride=stride, cin=Cin,
                               ht=ht, leaky=leaky, slope=slope)
    return pl.pallas_call(
        kernel,
        out_shape=jax.ShapeDtypeStruct((BP, Hout, Cout), compute_dtype),
        grid=(n_c, n_h),     # h innermost => each weight Cout-tile is DMA'd once
        in_specs=[
            pl.BlockSpec((BP, hg, stride * Cin), lambda j, i: (0, 0, 0)),  # resident input
            pl.BlockSpec((K, Cin, ct), lambda j, i: (0, 0, j)),            # weight Cout tile
            pl.BlockSpec((1, ct), lambda j, i: (0, j)),                    # bias Cout tile
        ],
        out_specs=pl.BlockSpec((BP, ht, ct), lambda j, i: (0, i, j)),
        compiler_params=pltpu.CompilerParams(
            dimension_semantics=("parallel", "parallel"),
            vmem_limit_bytes=_vmem_limit_bytes(),
        ),
    )(xr, w.astype(compute_dtype), b.reshape(1, Cout).astype(jnp.float32))


# ------------------------- parameter initialization --------------------------
def init_params(key, in_channels=1, out_channels=1, kernel_sizes=(5, 3), channels=32,
                downsample_scales=(3, 3, 3, 3, 1), max_downsample_channels=1024):
    params = {"convs": []}
    in_chs, out_chs = in_channels, channels
    for ds in downsample_scales:
        key, k1, k2 = jax.random.split(key, 3)
        K = kernel_sizes[0]
        w = jax.random.normal(k1, (K, in_chs, out_chs), jnp.float32) / np.sqrt(in_chs * K)
        bias = jax.random.normal(k2, (out_chs,), jnp.float32) * 0.01
        params["convs"].append((w, bias, int(ds)))
        in_chs = out_chs
        out_chs = min(out_chs * 4, max_downsample_channels)
    key, k1, k2 = jax.random.split(key, 3)
    Kp = kernel_sizes[1] - 1
    w = jax.random.normal(k1, (Kp, out_chs, out_channels), jnp.float32) / np.sqrt(out_chs * Kp)
    bias = jax.random.normal(k2, (out_channels,), jnp.float32) * 0.01
    params["conv_post"] = (w, bias, (kernel_sizes[1] - 1) // 2)
    return params


# ------------------------------ forward pass ----------------------------------
def period_discriminator_forward(x, params, period=3, *, compute_dtype=jnp.float32,
                                 m_tile=256, c_tile=256):
    """x: (B, C_in, T) like the PyTorch module.  Returns (flat_out, fmap[NCHW])."""
    b, c, t = x.shape
    if t % period != 0:
        n_pad = period - t % period
        mode = "reflect" if t > n_pad else "edge"   # reflect needs n_pad <= t-1
        x = jnp.pad(x, ((0, 0), (0, 0), (0, n_pad)), mode=mode)
        t = t + n_pad
    # NCT -> NCHW view -> kernel layout (B*P, H, C): channels-last, H on sublanes.
    h = x.reshape(b, c, t // period, period)         # (B, C, H, P)
    h = jnp.transpose(h, (0, 3, 2, 1)).reshape(b * period, t // period, c)

    feats = []                                       # kept in kernel layout
    for (w, bias, stride) in params["convs"]:
        K = w.shape[0]
        h = conv2d_k1(h, w, bias, stride=stride, pad=(K - 1) // 2, leaky=True,
                      compute_dtype=compute_dtype, m_tile=m_tile, c_tile=c_tile)
        feats.append(h)
    w, bias, pad = params["conv_post"]
    h = conv2d_k1(h, w, bias, stride=1, pad=pad, leaky=False,
                  compute_dtype=compute_dtype, m_tile=m_tile, c_tile=c_tile)
    feats.append(h)

    # torch-facing formatting, deferred to the end: one NCHW transpose per fmap entry.
    def to_nchw(a):
        bp, hh, cc = a.shape
        return jnp.transpose(a.reshape(b, period, hh, cc), (0, 3, 2, 1))
    fmap = [to_nchw(a) for a in feats]
    out = fmap[-1].reshape(b, -1)                    # flatten dims 1..-1 (C, H, P order)
    return out, fmap


# ------------------------- pure-JAX reference (check) -------------------------
def _ref_forward(x, params, period=3):
    b, c, t = x.shape
    if t % period != 0:
        n_pad = period - t % period
        mode = "reflect" if t > n_pad else "edge"
        x = jnp.pad(x, ((0, 0), (0, 0), (0, n_pad)), mode=mode)
        t = t + n_pad
    h = x.reshape(b, c, t // period, period)
    fmap = []
    for (w, bias, stride) in params["convs"]:
        K = w.shape[0]
        wk = jnp.transpose(w, (2, 1, 0))[:, :, :, None]     # (Cout, Cin, K, 1)
        h = jax.lax.conv_general_dilated(
            h, wk, window_strides=(stride, 1),
            padding=(((K - 1) // 2, (K - 1) // 2), (0, 0)),
            dimension_numbers=("NCHW", "OIHW", "NCHW"))
        h = h + bias[None, :, None, None]
        h = jnp.where(h >= 0, h, 0.1 * h)
        fmap.append(h)
    w, bias, pad = params["conv_post"]
    wk = jnp.transpose(w, (2, 1, 0))[:, :, :, None]
    h = jax.lax.conv_general_dilated(
        h, wk, window_strides=(1, 1), padding=((pad, pad), (0, 0)),
        dimension_numbers=("NCHW", "OIHW", "NCHW"))
    h = h + bias[None, :, None, None]
    fmap.append(h)
    return h.reshape(b, -1), fmap


# ----------------------------------- main --------------------------------------
if __name__ == "__main__":
    key = jax.random.PRNGKey(0)
    kx, kp, kx2 = jax.random.split(key, 3)

    B, C_IN, PERIOD = 2, 1, 3
    params = init_params(kp, in_channels=C_IN)

    # 1) small input (T not divisible by period -> reflect-pad path; single-tile grids)
    x_small = jax.random.normal(kx, (B, C_IN, 47), jnp.float32)
    out, fmap = period_discriminator_forward(x_small, params, period=PERIOD)
    out = jax.block_until_ready(out)
    ref_out, ref_fmap = _ref_forward(x_small, params, period=PERIOD)
    assert out.shape == ref_out.shape, (out.shape, ref_out.shape)
    np.testing.assert_allclose(np.asarray(out), np.asarray(ref_out), rtol=1e-4, atol=1e-4)
    for f, rf in zip(fmap, ref_fmap):
        assert f.shape == rf.shape, (f.shape, rf.shape)
        np.testing.assert_allclose(np.asarray(f), np.asarray(rf), rtol=1e-4, atol=1e-4)

    # 2) longer input: exercises the (Cout-tile, Hout-tile) grid and partial edge tiles
    x_big = jax.random.normal(kx2, (B, C_IN, 2000), jnp.float32)
    out_b, fmap_b = period_discriminator_forward(x_big, params, period=PERIOD)
    out_b = jax.block_until_ready(out_b)
    ref_out_b, ref_fmap_b = _ref_forward(x_big, params, period=PERIOD)
    assert out_b.shape == ref_out_b.shape, (out_b.shape, ref_out_b.shape)
    np.testing.assert_allclose(np.asarray(out_b), np.asarray(ref_out_b), rtol=5e-4, atol=5e-4)
    for f, rf in zip(fmap_b, ref_fmap_b):
        assert f.shape == rf.shape, (f.shape, rf.shape)
        np.testing.assert_allclose(np.asarray(f), np.asarray(rf), rtol=5e-4, atol=5e-4)

    # 3) bf16 storage / MXU-input path (f32 accumulation): loose sanity check only
    out_h, _ = period_discriminator_forward(x_small, params, period=PERIOD,
                                            compute_dtype=jnp.bfloat16)
    out_h = jax.block_until_ready(out_h)
    assert out_h.shape == ref_out.shape
    out_h32 = np.asarray(out_h.astype(jnp.float32))
    assert np.all(np.isfinite(out_h32))
    np.testing.assert_allclose(out_h32, np.asarray(ref_out), rtol=1e-1, atol=1e-1)

    print("KERNEL_OK")
</pallas_src>

<mosaic_0001>
module attributes {stable_mosaic.version = 11 : i64} {
  func.func @_conv_k1_kernel(%arg0: i32, %arg1: i32, %arg2: memref<6x7x3xf32, #tpu.memory_space<vmem>>, %arg3: memref<5x1x32xf32, #tpu.memory_space<vmem>>, %arg4: memref<1x32xf32, #tpu.memory_space<vmem>>, %arg5: memref<6x6x32xf32, #tpu.memory_space<vmem>>) attributes {dimension_semantics = [#tpu.dimension_semantics<parallel>, #tpu.dimension_semantics<parallel>], iteration_bounds = array<i64: 1, 1>, scalar_prefetch = 0 : i64, scratch_operands = 0 : i64, tpu.core_type = #tpu.core_type<tc>, window_params = [{pipeline_mode = #tpu.pipeline_mode<synchronous>, transform_indices = @transform_0, window_bounds = array<i64: 6, 7, 3>}, {transform_indices = @transform_1, window_bounds = array<i64: 5, 1, 32>}, {transform_indices = @transform_2, window_bounds = array<i64: 1, 32>}, {transform_indices = @transform_3, window_bounds = array<i64: 6, 6, 32>}]} {
    %c6_i32 = arith.constant 6 : i32
    %0 = arith.muli %arg1, %c6_i32 : i32
    %cst = arith.constant 0.000000e+00 : f32
    %1 = vector.broadcast %cst : f32 to vector<36x32xf32>
    %c0_i32 = arith.constant 0 : i32
    %2 = arith.addi %0, %c0_i32 : i32
    %c0 = arith.constant 0 : index
    %3 = arith.index_cast %2 : i32 to index
    %c0_0 = arith.constant 0 : index
    %4 = vector.load %arg2[%c0, %3, %c0_0] : memref<6x7x3xf32, #tpu.memory_space<vmem>>, vector<6x6x1xf32>
    %5 = vector.shape_cast %4 : vector<6x6x1xf32> to vector<36x1xf32>
    %c0_1 = arith.constant 0 : index
    %c0_2 = arith.constant 0 : index
    %c0_3 = arith.constant 0 : index
    %6 = vector.load %arg3[%c0_1, %c0_2, %c0_3] : memref<5x1x32xf32, #tpu.memory_space<vmem>>, vector<1x1x32xf32>
    %7 = vector.shape_cast %6 : vector<1x1x32xf32> to vector<1x32xf32>
    %8 = vector.broadcast %5 : vector<36x1xf32> to vector<36x32xf32>
    %9 = vector.broadcast %7 : vector<1x32xf32> to vector<36x32xf32>
    %10 = arith.mulf %8, %9 : vector<36x32xf32>
    %11 = arith.addf %1, %10 : vector<36x32xf32>
    %c0_i32_4 = arith.constant 0 : i32
    %12 = arith.addi %0, %c0_i32_4 : i32
    %c0_5 = arith.constant 0 : index
    %13 = arith.index_cast %12 : i32 to index
    %c1 = arith.constant 1 : index
    %14 = vector.load %arg2[%c0_5, %13, %c1] : memref<6x7x3xf32, #tpu.memory_space<vmem>>, vector<6x6x1xf32>
    %15 = vector.shape_cast %14 : vector<6x6x1xf32> to vector<36x1xf32>
    %c1_6 = arith.constant 1 : index
    %c0_7 = arith.constant 0 : index
    %c0_8 = arith.constant 0 : index
    %16 = vector.load %arg3[%c1_6, %c0_7, %c0_8] : memref<5x1x32xf32, #tpu.memory_space<vmem>>, vector<1x1x32xf32>
    %17 = vector.shape_cast %16 : vector<1x1x32xf32> to vector<1x32xf32>
    %18 = vector.broadcast %15 : vector<36x1xf32> to vector<36x32xf32>
    %19 = vector.broadcast %17 : vector<1x32xf32> to vector<36x32xf32>
    %20 = arith.mulf %18, %19 : vector<36x32xf32>
    %21 = arith.addf %11, %20 : vector<36x32xf32>
    %c0_i32_9 = arith.constant 0 : i32
    %22 = arith.addi %0, %c0_i32_9 : i32
    %c0_10 = arith.constant 0 : index
    %23 = arith.index_cast %22 : i32 to index
    %c2 = arith.constant 2 : index
    %24 = vector.load %arg2[%c0_10, %23, %c2] : memref<6x7x3xf32, #tpu.memory_space<vmem>>, vector<6x6x1xf32>
    %25 = vector.shape_cast %24 : vector<6x6x1xf32> to vector<36x1xf32>
    %c2_11 = arith.constant 2 : index
    %c0_12 = arith.constant 0 : index
    %c0_13 = arith.constant 0 : index
    %26 = vector.load %arg3[%c2_11, %c0_12, %c0_13] : memref<5x1x32xf32, #tpu.memory_space<vmem>>, vector<1x1x32xf32>
    %27 = vector.shape_cast %26 : vector<1x1x32xf32> to vector<1x32xf32>
    %28 = vector.broadcast %25 : vector<36x1xf32> to vector<36x32xf32>
    %29 = vector.broadcast %27 : vector<1x32xf32> to vector<36x32xf32>
    %30 = arith.mulf %28, %29 : vector<36x32xf32>
    %31 = arith.addf %21, %30 : vector<36x32xf32>
    %c1_i32 = arith.constant 1 : i32
    %32 = arith.addi %0, %c1_i32 : i32
    %c0_14 = arith.constant 0 : index
    %33 = arith.index_cast %32 : i32 to index
    %c0_15 = arith.constant 0 : index
    %34 = vector.load %arg2[%c0_14, %33, %c0_15] : memref<6x7x3xf32, #tpu.memory_space<vmem>>, vector<6x6x1xf32>
    %35 = vector.shape_cast %34 : vector<6x6x1xf32> to vector<36x1xf32>
    %c3 = arith.constant 3 : index
    %c0_16 = arith.constant 0 : index
    %c0_17 = arith.constant 0 : index
    %36 = vector.load %arg3[%c3, %c0_16, %c0_17] : memref<5x1x32xf32, #tpu.memory_space<vmem>>, vector<1x1x32xf32>
    %37 = vector.shape_cast %36 : vector<1x1x32xf32> to vector<1x32xf32>
    %38 = vector.broadcast %35 : vector<36x1xf32> to vector<36x32xf32>
    %39 = vector.broadcast %37 : vector<1x32xf32> to vector<36x32xf32>
    %40 = arith.mulf %38, %39 : vector<36x32xf32>
    %41 = arith.addf %31, %40 : vector<36x32xf32>
    %c1_i32_18 = arith.constant 1 : i32
    %42 = arith.addi %0, %c1_i32_18 : i32
    %c0_19 = arith.constant 0 : index
    %43 = arith.index_cast %42 : i32 to index
    %c1_20 = arith.constant 1 : index
    %44 = vector.load %arg2[%c0_19, %43, %c1_20] : memref<6x7x3xf32, #tpu.memory_space<vmem>>, vector<6x6x1xf32>
    %45 = vector.shape_cast %44 : vector<6x6x1xf32> to vector<36x1xf32>
    %c4 = arith.constant 4 : index
    %c0_21 = arith.constant 0 : index
    %c0_22 = arith.constant 0 : index
    %46 = vector.load %arg3[%c4, %c0_21, %c0_22] : memref<5x1x32xf32, #tpu.memory_space<vmem>>, vector<1x1x32xf32>
    %47 = vector.shape_cast %46 : vector<1x1x32xf32> to vector<1x32xf32>
    %48 = vector.broadcast %45 : vector<36x1xf32> to vector<36x32xf32>
    %49 = vector.broadcast %47 : vector<1x32xf32> to vector<36x32xf32>
    %50 = arith.mulf %48, %49 : vector<36x32xf32>
    %51 = arith.addf %41, %50 : vector<36x32xf32>
    %c0_23 = arith.constant 0 : index
    %c0_24 = arith.constant 0 : index
    %52 = vector.load %arg4[%c0_23, %c0_24] : memref<1x32xf32, #tpu.memory_space<vmem>>, vector<1x32xf32>
    %53 = vector.broadcast %52 : vector<1x32xf32> to vector<36x32xf32>
    %54 = arith.addf %51, %53 : vector<36x32xf32>
    %cst_25 = arith.constant 0.000000e+00 : f32
    %55 = vector.broadcast %cst_25 : f32 to vector<36x32xf32>
    %56 = arith.cmpf oge, %54, %55 : vector<36x32xf32>
    %cst_26 = arith.constant 1.000000e-01 : f32
    %57 = vector.broadcast %cst_26 : f32 to vector<36x32xf32>
    %58 = arith.mulf %57, %54 : vector<36x32xf32>
    %59 = arith.select %56, %54, %58 : vector<36x32xi1>, vector<36x32xf32>
    %60 = vector.shape_cast %59 : vector<36x32xf32> to vector<6x6x32xf32>
    %c0_27 = arith.constant 0 : index
    %c0_28 = arith.constant 0 : index
    %c0_29 = arith.constant 0 : index
    %61 = vector.load %arg5[%c0_27, %c0_28, %c0_29] : memref<6x6x32xf32, #tpu.memory_space<vmem>>, vector<6x6x32xf32>
    tpu.vector_store %arg5[%c0_27, %c0_28, %c0_29], %60 {strides = array<i32>} : memref<6x6x32xf32, #tpu.memory_space<vmem>>, vector<6x6x32xf32>,
    return
  }
  func.func @transform_0(%arg0: i32, %arg1: i32) -> (i32, i32, i32) {
    %c0_i32 = arith.constant 0 : i32
    %c0_i32_0 = arith.constant 0 : i32
    %c0_i32_1 = arith.constant 0 : i32
    %c0_i32_2 = arith.constant 0 : i32
    return %c0_i32, %c0_i32_0, %c0_i32_1 : i32, i32, i32
  }
  func.func @transform_1(%arg0: i32, %arg1: i32) -> (i32, i32, i32) {
    %c0_i32 = arith.constant 0 : i32
    %c0_i32_0 = arith.constant 0 : i32
    %c0_i32_1 = arith.constant 0 : i32
    return %c0_i32, %c0_i32_0, %arg0 : i32, i32, i32
  }
  func.func @transform_2(%arg0: i32, %arg1: i32) -> (i32, i32) {
    %c0_i32 = arith.constant 0 : i32
    %c0_i32_0 = arith.constant 0 : i32
    return %c0_i32, %arg0 : i32, i32
  }
  func.func @transform_3(%arg0: i32, %arg1: i32) -> (i32, i32, i32) {
    %c0_i32 = arith.constant 0 : i32
    %c0_i32_0 = arith.constant 0 : i32
    return %c0_i32, %arg1, %arg0 : i32, i32, i32
  }
}

</mosaic_0001>

<llo_original>
// kernel: tpu_custom_call.1
$region0: #{tpu_custom_call.1}
  #allocation0 [shape = 'u32[]', space=smem, size = 0x4, offset = 0x4, fixed_abs, tag = 'smem constant byte address 0x4 - core index']
  #allocation1 [shape = 'u32[72,128]{1,0:T(1,128)}', space=vmem, size = 0x9000, scoped, tag = 'internal scratch']
  %s0 = inlined_call_operand.vmem [shape: f32[6,7,3], index: 0, kind: input, shape index: {}]
  %s1 = inlined_call_operand.vmem [shape: f32[5,1,32], index: 1, kind: input, shape index: {}]
  %s2 = inlined_call_operand.vmem [shape: f32[1,32], index: 2, kind: input, shape index: {}]
  %s3 = inlined_call_operand.hbm [shape: f32[6,6,32], index: 3, kind: output, shape index: {}]
  %s4 = sld [smem:[#allocation0]]
  $region22: #{tpu_custom_call.1} parent=0
    _
  %s6 = ssub.s32 1, %s4
  %s7 = scalar_select 0, %s6, %s4
  $region1: #{tpu_custom_call.1} parent=0
    #allocation2 [shape = 'u8[24576]{0}', space=vmem, size = 0x6000, scoped, tag = 'output window, operand 0, single buffered']
    #allocation3 [shape = 's32[1]{0}', space=sflag, size = 0x4, scoped, tag = 'scoped memory for tpu_custom_call.1']
    %8 = vsyncpa [#allocation3], 0
    // Predicated region
    $region2: #{tpu_custom_call.1} parent=1 // pred_check
      _
    $region3: #{tpu_custom_call.1} parent=1 // pred_check_branch
      %10 = sbr.rel (0) target = $region5
    $region4: #{tpu_custom_call.1} parent=1 // pred_region
      _
    $region5: #{tpu_custom_call.1} parent=1 // pred_fallthru
      _
    // Predicated region
    $region6: #{tpu_custom_call.1} parent=1 // pred_check
      _
    $region7: #{tpu_custom_call.1} parent=1 // pred_check_branch
      %12 = sbr.rel (0) target = $region9
    $region8: #{tpu_custom_call.1} parent=1 // pred_region
      _
    $region9: #{tpu_custom_call.1} parent=1 // pred_fallthru
      _
    // Predicated region
    $region10: #{tpu_custom_call.1} parent=1 // pred_check
      _
    $region11: #{tpu_custom_call.1} parent=1 // pred_check_branch
      %14 = sbr.rel (0) target = $region13
    $region12: #{tpu_custom_call.1} parent=1 // pred_region
      _
    $region13: #{tpu_custom_call.1} parent=1 // pred_fallthru
      _
    %s15 = smul.u32 0, 6
    %s16 = scalar_lea.vmem %s0, %s15
    %v17 = vld [vmem:[%s16] sm:$0x3f]
    %v18 = vld [vmem:[%s16 + $0x8] sm:$0x3f]
    %v19 = vld [vmem:[%s16 + $0x10] sm:$0x3f]
    %v20 = vld [vmem:[%s16 + $0x18] sm:$0x3f]
    %v21 = vld [vmem:[%s16 + $0x20] sm:$0x3f]
    %v22 = vld [vmem:[%s16 + $0x28] sm:$0x3f]
    %v29 = vrot.slane %v17, 2
    %v30 = vrot.slane %v17, 4
    %v31 = vrot.slane %v18, 2
    %v32 = vrot.slane %v18, 4
    %v33 = vrot.slane %v19, 2
    %v34 = vrot.slane %v19, 4
    %v35 = vrot.slane %v20, 2
    %v36 = vrot.slane %v20, 4
    %v37 = vrot.slane %v21, 2
    %v38 = vrot.slane %v21, 4
    %v39 = vrot.slane %v22, 2
    %v40 = vrot.slane %v22, 4
    %v41 = vld [vmem:[%s1] sm:$0x1]
    %42 = vset.pattern.permute.xlu0 0
    %43 = vperm.xlu0 %42, %v17
    %v44 = vpop.permute.xlu0 %43
    %v47 = vunpack.c.l.s4 269488144
    %v48 = vunpack.c.0.s8 %v47
    %v49 = vperm.slane %v44, %v48
    %50 = vset.pattern.permute.xlu0 0
    %51 = vperm.xlu0 %50, %v29
    %v52 = vpop.permute.xlu0 %51
    %v55 = vunpack.c.l.s4 269488144
    %v56 = vunpack.c.0.s8 %v55
    %v57 = vperm.slane %v52, %v56
    %58 = vset.pattern.permute.xlu0 0
    %59 = vperm.xlu0 %58, %v30
    %v60 = vpop.permute.xlu0 %59
    %v63 = vunpack.c.l.s4 269488144
    %v64 = vunpack.c.0.s8 %v63
    %v65 = vperm.slane %v60, %v64
    %66 = vset.pattern.permute.xlu0 0
    %67 = vperm.xlu0 %66, %v18
    %v68 = vpop.permute.xlu0 %67
    %v71 = vunpack.c.l.s4 269488144
    %v72 = vunpack.c.0.s8 %v71
    %v73 = vperm.slane %v68, %v72
    %74 = vset.pattern.permute.xlu0 0
    %75 = vperm.xlu0 %74, %v31
    %v76 = vpop.permute.xlu0 %75
    %v79 = vunpack.c.l.s4 269488144
    %v80 = vunpack.c.0.s8 %v79
    %v81 = vperm.slane %v76, %v80
    %82 = vset.pattern.permute.xlu0 0
    %83 = vperm.xlu0 %82, %v32
    %v84 = vpop.permute.xlu0 %83
    %v87 = vunpack.c.l.s4 269488144
    %v88 = vunpack.c.0.s8 %v87
    %v89 = vperm.slane %v84, %v88
    %90 = vset.pattern.permute.xlu0 0
    %91 = vperm.xlu0 %90, %v19
    %v92 = vpop.permute.xlu0 %91
    %v95 = vunpack.c.l.s4 269488144
    %v96 = vunpack.c.0.s8 %v95
    %v97 = vperm.slane %v92, %v96
    %98 = vset.pattern.permute.xlu0 0
    %99 = vperm.xlu0 %98, %v33
    %v100 = vpop.permute.xlu0 %99
    %v103 = vunpack.c.l.s4 269488144
    %v104 = vunpack.c.0.s8 %v103
    %v105 = vperm.slane %v100, %v104
    %106 = vset.pattern.permute.xlu0 0
    %107 = vperm.xlu0 %106, %v34
    %v108 = vpop.permute.xlu0 %107
    %v111 = vunpack.c.l.s4 269488144
    %v112 = vunpack.c.0.s8 %v111
    %v113 = vperm.slane %v108, %v112
    %114 = vset.pattern.permute.xlu0 0
    %115 = vperm.xlu0 %114, %v20
    %v116 = vpop.permute.xlu0 %115
    %v119 = vunpack.c.l.s4 269488144
    %v120 = vunpack.c.0.s8 %v119
    %v121 = vperm.slane %v116, %v120
    %122 = vset.pattern.permute.xlu0 0
    %123 = vperm.xlu0 %122, %v35
    %v124 = vpop.permute.xlu0 %123
    %v127 = vunpack.c.l.s4 269488144
    %v128 = vunpack.c.0.s8 %v127
    %v129 = vperm.slane %v124, %v128
    %130 = vset.pattern.permute.xlu0 0
    %131 = vperm.xlu0 %130, %v36
    %v132 = vpop.permute.xlu0 %131
    %v135 = vunpack.c.l.s4 269488144
    %v136 = vunpack.c.0.s8 %v135
    %v137 = vperm.slane %v132, %v136
    %138 = vset.pattern.permute.xlu0 0
    %139 = vperm.xlu0 %138, %v21
    %v140 = vpop.permute.xlu0 %139
    %v143 = vunpack.c.l.s4 269488144
    %v144 = vunpack.c.0.s8 %v143
    %v145 = vperm.slane %v140, %v144
    %146 = vset.pattern.permute.xlu0 0
    %147 = vperm.xlu0 %146, %v37
    %v148 = vpop.permute.xlu0 %147
    %v151 = vunpack.c.l.s4 269488144
    %v152 = vunpack.c.0.s8 %v151
    %v153 = vperm.slane %v148, %v152
    %154 = vset.pattern.permute.xlu0 0
    %155 = vperm.xlu0 %154, %v38
    %v156 = vpop.permute.xlu0 %155
    %v159 = vunpack.c.l.s4 269488144
    %v160 = vunpack.c.0.s8 %v159
    %v161 = vperm.slane %v156, %v160
    %162 = vset.pattern.permute.xlu0 0
    %163 = vperm.xlu0 %162, %v22
    %v164 = vpop.permute.xlu0 %163
    %v167 = vunpack.c.l.s4 269488144
    %v168 = vunpack.c.0.s8 %v167
    %v169 = vperm.slane %v164, %v168
    %170 = vset.pattern.permute.xlu0 0
    %171 = vperm.xlu0 %170, %v39
    %v172 = vpop.permute.xlu0 %171
    %v175 = vunpack.c.l.s4 269488144
    %v176 = vunpack.c.0.s8 %v175
    %v177 = vperm.slane %v172, %v176
    %178 = vset.pattern.permute.xlu0 0
    %179 = vperm.xlu0 %178, %v40
    %v180 = vpop.permute.xlu0 %179
    %v183 = vunpack.c.l.s4 269488144
    %v184 = vunpack.c.0.s8 %v183
    %v185 = vperm.slane %v180, %v184
    %v187 = vperm.slane %v41, 0
    %v189 = vrot.slane %v187, 2
    %v190 = vrot.slane %v187, 4
    %v191 = vrot.slane %v187, 6
    %v195 = vmul.f32 %v49, %v187
    %v196 = vmul.f32 %v57, %v189
    %v197 = vmul.f32 %v65, %v190
    %v198 = vmul.f32 %v73, %v191
    %v199 = vmul.f32 %v81, %v187
    %v200 = vmul.f32 %v89, %v189
    %v201 = vmul.f32 %v97, %v190
    %v202 = vmul.f32 %v105, %v191
    %v203 = vmul.f32 %v113, %v187
    %v204 = vmul.f32 %v121, %v189
    %v205 = vmul.f32 %v129, %v190
    %v206 = vmul.f32 %v137, %v191
    %v207 = vmul.f32 %v145, %v187
    %v208 = vmul.f32 %v153, %v189
    %v209 = vmul.f32 %v161, %v190
    %v210 = vmul.f32 %v169, %v191
    %v211 = vmul.f32 %v177, %v187
    %v212 = vmul.f32 %v185, %v189
    %v213 = vadd.f32 %v195, 0.0
    %v214 = vadd.f32 %v196, 0.0
    %v215 = vadd.f32 %v197, 0.0
    %v216 = vadd.f32 %v198, 0.0
    %v217 = vadd.f32 %v199, 0.0
    %v218 = vadd.f32 %v200, 0.0
    %v219 = vadd.f32 %v201, 0.0
    %v220 = vadd.f32 %v202, 0.0
    %v221 = vadd.f32 %v203, 0.0
    %v222 = vadd.f32 %v204, 0.0
    %v223 = vadd.f32 %v205, 0.0
    %v224 = vadd.f32 %v206, 0.0
    %v225 = vadd.f32 %v207, 0.0
    %v226 = vadd.f32 %v208, 0.0
    %v227 = vadd.f32 %v209, 0.0
    %v228 = vadd.f32 %v210, 0.0
    %v229 = vadd.f32 %v211, 0.0
    %v230 = vadd.f32 %v212, 0.0
    %s231 = scalar_lea.vmem %s1, 1
    %v232 = vld [vmem:[%s231] sm:$0x1]
    %233 = vset.pattern.permute.xlu0 1
    %234 = vperm.xlu0 %233, %v17
    %v235 = vpop.permute.xlu0 %234
    %v238 = vunpack.c.l.s4 269488144
    %v239 = vunpack.c.0.s8 %v238
    %v240 = vperm.slane %v235, %v239
    %241 = vset.pattern.permute.xlu0 1
    %242 = vperm.xlu0 %241, %v29
    %v243 = vpop.permute.xlu0 %242
    %v246 = vunpack.c.l.s4 269488144
    %v247 = vunpack.c.0.s8 %v246
    %v248 = vperm.slane %v243, %v247
    %249 = vset.pattern.permute.xlu0 1
    %250 = vperm.xlu0 %249, %v30
    %v251 = vpop.permute.xlu0 %250
    %v254 = vunpack.c.l.s4 269488144
    %v255 = vunpack.c.0.s8 %v254
    %v256 = vperm.slane %v251, %v255
    %257 = vset.pattern.permute.xlu0 1
    %258 = vperm.xlu0 %257, %v18
    %v259 = vpop.permute.xlu0 %258
    %v262 = vunpack.c.l.s4 269488144
    %v263 = vunpack.c.0.s8 %v262
    %v264 = vperm.slane %v259, %v263
    %265 = vset.pattern.permute.xlu0 1
    %266 = vperm.xlu0 %265, %v31
    %v267 = vpop.permute.xlu0 %266
    %v270 = vunpack.c.l.s4 269488144
    %v271 = vunpack.c.0.s8 %v270
    %v272 = vperm.slane %v267, %v271
    %273 = vset.pattern.permute.xlu0 1
    %274 = vperm.xlu0 %273, %v32
    %v275 = vpop.permute.xlu0 %274
    %v278 = vunpack.c.l.s4 269488144
    %v279 = vunpack.c.0.s8 %v278
    %v280 = vperm.slane %v275, %v279
    %281 = vset.pattern.permute.xlu0 1
    %282 = vperm.xlu0 %281, %v19
    %v283 = vpop.permute.xlu0 %282
    %v286 = vunpack.c.l.s4 269488144
    %v287 = vunpack.c.0.s8 %v286
    %v288 = vperm.slane %v283, %v287
    %289 = vset.pattern.permute.xlu0 1
    %290 = vperm.xlu0 %289, %v33
    %v291 = vpop.permute.xlu0 %290
    %v294 = vunpack.c.l.s4 269488144
    %v295 = vunpack.c.0.s8 %v294
    %v296 = vperm.slane %v291, %v295
    %297 = vset.pattern.permute.xlu0 1
    %298 = vperm.xlu0 %297, %v34
    %v299 = vpop.permute.xlu0 %298
    %v302 = vunpack.c.l.s4 269488144
    %v303 = vunpack.c.0.s8 %v302
    %v304 = vperm.slane %v299, %v303
    %305 = vset.pattern.permute.xlu0 1
    %306 = vperm.xlu0 %305, %v20
    %v307 = vpop.permute.xlu0 %306
    %v310 = vunpack.c.l.s4 269488144
    %v311 = vunpack.c.0.s8 %v310
    %v312 = vperm.slane %v307, %v311
    %313 = vset.pattern.permute.xlu0 1
    %314 = vperm.xlu0 %313, %v35
    %v315 = vpop.permute.xlu0 %314
    %v318 = vunpack.c.l.s4 269488144
    %v319 = vunpack.c.0.s8 %v318
    %v320 = vperm.slane %v315, %v319
    %321 = vset.pattern.permute.xlu0 1
    %322 = vperm.xlu0 %321, %v36
    %v323 = vpop.permute.xlu0 %322
    %v326 = vunpack.c.l.s4 269488144
    %v327 = vunpack.c.0.s8 %v326
    %v328 = vperm.slane %v323, %v327
    %329 = vset.pattern.permute.xlu0 1
    %330 = vperm.xlu0 %329, %v21
    %v331 = vpop.permute.xlu0 %330
    %v334 = vunpack.c.l.s4 269488144
    %v335 = vunpack.c.0.s8 %v334
    %v336 = vperm.slane %v331, %v335
    %337 = vset.pattern.permute.xlu0 1
    %338 = vperm.xlu0 %337, %v37
    %v339 = vpop.permute.xlu0 %338
    %v342 = vunpack.c.l.s4 269488144
    %v343 = vunpack.c.0.s8 %v342
    %v344 = vperm.slane %v339, %v343
    %345 = vset.pattern.permute.xlu0 1
    %346 = vperm.xlu0 %345, %v38
    %v347 = vpop.permute.xlu0 %346
    %v350 = vunpack.c.l.s4 269488144
    %v351 = vunpack.c.0.s8 %v350
    %v352 = vperm.slane %v347, %v351
    %353 = vset.pattern.permute.xlu0 1
    %354 = vperm.xlu0 %353, %v22
    %v355 = vpop.permute.xlu0 %354
    %v358 = vunpack.c.l.s4 269488144
    %v359 = vunpack.c.0.s8 %v358
    %v360 = vperm.slane %v355, %v359
    %361 = vset.pattern.permute.xlu0 1
    %362 = vperm.xlu0 %361, %v39
    %v363 = vpop.permute.xlu0 %362
    %v366 = vunpack.c.l.s4 269488144
    %v367 = vunpack.c.0.s8 %v366
    %v368 = vperm.slane %v363, %v367
    %369 = vset.pattern.permute.xlu0 1
    %370 = vperm.xlu0 %369, %v40
    %v371 = vpop.permute.xlu0 %370
    %v374 = vunpack.c.l.s4 269488144
    %v375 = vunpack.c.0.s8 %v374
    %v376 = vperm.slane %v371, %v375
    %v378 = vperm.slane %v232, 0
    %v380 = vrot.slane %v378, 2
    %v381 = vrot.slane %v378, 4
    %v382 = vrot.slane %v378, 6
    %v386 = vmul.f32 %v240, %v378
    %v387 = vmul.f32 %v248, %v380
    %v388 = vmul.f32 %v256, %v381
    %v389 = vmul.f32 %v264, %v382
    %v390 = vmul.f32 %v272, %v378
    %v391 = vmul.f32 %v280, %v380
    %v392 = vmul.f32 %v288, %v381
    %v393 = vmul.f32 %v296, %v382
    %v394 = vmul.f32 %v304, %v378
    %v395 = vmul.f32 %v312, %v380
    %v396 = vmul.f32 %v320, %v381
    %v397 = vmul.f32 %v328, %v382
    %v398 = vmul.f32 %v336, %v378
    %v399 = vmul.f32 %v344, %v380
    %v400 = vmul.f32 %v352, %v381
    %v401 = vmul.f32 %v360, %v382
    %v402 = vmul.f32 %v368, %v378
    %v403 = vmul.f32 %v376, %v380
    %v404 = vadd.f32 %v213, %v386
    %v405 = vadd.f32 %v214, %v387
    %v406 = vadd.f32 %v215, %v388
    %v407 = vadd.f32 %v216, %v389
    %v408 = vadd.f32 %v217, %v390
    %v409 = vadd.f32 %v218, %v391
    %v410 = vadd.f32 %v219, %v392
    %v411 = vadd.f32 %v220, %v393
    %v412 = vadd.f32 %v221, %v394
    %v413 = vadd.f32 %v222, %v395
    %v414 = vadd.f32 %v223, %v396
    %v415 = vadd.f32 %v224, %v397
    %v416 = vadd.f32 %v225, %v398
    %v417 = vadd.f32 %v226, %v399
    %v418 = vadd.f32 %v227, %v400
    %v419 = vadd.f32 %v228, %v401
    %v420 = vadd.f32 %v229, %v402
    %v421 = vadd.f32 %v230, %v403
    %s422 = scalar_lea.vmem %s1, 2
    %v423 = vld [vmem:[%s422] sm:$0x1]
    %424 = vset.pattern.permute.xlu0 2
    %425 = vperm.xlu0 %424, %v17
    %v426 = vpop.permute.xlu0 %425
    %v429 = vunpack.c.l.s4 269488144
    %v430 = vunpack.c.0.s8 %v429
    %v431 = vperm.slane %v426, %v430
    %432 = vset.pattern.permute.xlu0 2
    %433 = vperm.xlu0 %432, %v29
    %v434 = vpop.permute.xlu0 %433
    %v437 = vunpack.c.l.s4 269488144
    %v438 = vunpack.c.0.s8 %v437
    %v439 = vperm.slane %v434, %v438
    %440 = vset.pattern.permute.xlu0 2
    %441 = vperm.xlu0 %440, %v30
    %v442 = vpop.permute.xlu0 %441
    %v445 = vunpack.c.l.s4 269488144
    %v446 = vunpack.c.0.s8 %v445
    %v447 = vperm.slane %v442, %v446
    %448 = vset.pattern.permute.xlu0 2
    %449 = vperm.xlu0 %448, %v18
    %v450 = vpop.permute.xlu0 %449
    %v453 = vunpack.c.l.s4 269488144
    %v454 = vunpack.c.0.s8 %v453
    %v455 = vperm.slane %v450, %v454
    %456 = vset.pattern.permute.xlu0 2
    %457 = vperm.xlu0 %456, %v31
    %v458 = vpop.permute.xlu0 %457
    %v461 = vunpack.c.l.s4 269488144
    %v462 = vunpack.c.0.s8 %v461
    %v463 = vperm.slane %v458, %v462
    %464 = vset.pattern.permute.xlu0 2
    %465 = vperm.xlu0 %464, %v32
    %v466 = vpop.permute.xlu0 %465
    %v469 = vunpack.c.l.s4 269488144
    %v470 = vunpack.c.0.s8 %v469
    %v471 = vperm.slane %v466, %v470
    %472 = vset.pattern.permute.xlu0 2
    %473 = vperm.xlu0 %472, %v19
    %v474 = vpop.permute.xlu0 %473
    %v477 = vunpack.c.l.s4 269488144
    %v478 = vunpack.c.0.s8 %v477
    %v479 = vperm.slane %v474, %v478
    %480 = vset.pattern.permute.xlu0 2
    %481 = vperm.xlu0 %480, %v33
    %v482 = vpop.permute.xlu0 %481
    %v485 = vunpack.c.l.s4 269488144
    %v486 = vunpack.c.0.s8 %v485
    %v487 = vperm.slane %v482, %v486
    %488 = vset.pattern.permute.xlu0 2
    %489 = vperm.xlu0 %488, %v34
    %v490 = vpop.permute.xlu0 %489
    %v493 = vunpack.c.l.s4 269488144
    %v494 = vunpack.c.0.s8 %v493
    %v495 = vperm.slane %v490, %v494
    %496 = vset.pattern.permute.xlu0 2
    %497 = vperm.xlu0 %496, %v20
    %v498 = vpop.permute.xlu0 %497
    %v501 = vunpack.c.l.s4 269488144
    %v502 = vunpack.c.0.s8 %v501
    %v503 = vperm.slane %v498, %v502
    %504 = vset.pattern.permute.xlu0 2
    %505 = vperm.xlu0 %504, %v35
    %v506 = vpop.permute.xlu0 %505
    %v509 = vunpack.c.l.s4 269488144
    %v510 = vunpack.c.0.s8 %v509
    %v511 = vperm.slane %v506, %v510
    %512 = vset.pattern.permute.xlu0 2
    %513 = vperm.xlu0 %512, %v36
    %v514 = vpop.permute.xlu0 %513
    %v517 = vunpack.c.l.s4 269488144
    %v518 = vunpack.c.0.s8 %v517
    %v519 = vperm.slane %v514, %v518
    %520 = vset.pattern.permute.xlu0 2
    %521 = vperm.xlu0 %520, %v21
    %v522 = vpop.permute.xlu0 %521
    %v525 = vunpack.c.l.s4 269488144
    %v526 = vunpack.c.0.s8 %v525
    %v527 = vperm.slane %v522, %v526
    %528 = vset.pattern.permute.xlu0 2
    %529 = vperm.xlu0 %528, %v37
    %v530 = vpop.permute.xlu0 %529
    %v533 = vunpack.c.l.s4 269488144
    %v534 = vunpack.c.0.s8 %v533
    %v535 = vperm.slane %v530, %v534
    %536 = vset.pattern.permute.xlu0 2
    %537 = vperm.xlu0 %536, %v38
    %v538 = vpop.permute.xlu0 %537
    %v541 = vunpack.c.l.s4 269488144
    %v542 = vunpack.c.0.s8 %v541
    %v543 = vperm.slane %v538, %v542
    %544 = vset.pattern.permute.xlu0 2
    %545 = vperm.xlu0 %544, %v22
    %v546 = vpop.permute.xlu0 %545
    %v549 = vunpack.c.l.s4 269488144
    %v550 = vunpack.c.0.s8 %v549
    %v551 = vperm.slane %v546, %v550
    %552 = vset.pattern.permute.xlu0 2
    %553 = vperm.xlu0 %552, %v39
    %v554 = vpop.permute.xlu0 %553
    %v557 = vunpack.c.l.s4 269488144
    %v558 = vunpack.c.0.s8 %v557
    %v559 = vperm.slane %v554, %v558
    %560 = vset.pattern.permute.xlu0 2
    %561 = vperm.xlu0 %560, %v40
    %v562 = vpop.permute.xlu0 %561
    %v565 = vunpack.c.l.s4 269488144
    %v566 = vunpack.c.0.s8 %v565
    %v567 = vperm.slane %v562, %v566
    %v569 = vperm.slane %v423, 0
    %v571 = vrot.slane %v569, 2
    %v572 = vrot.slane %v569, 4
    %v573 = vrot.slane %v569, 6
    %v577 = vmul.f32 %v431, %v569
    %v578 = vmul.f32 %v439, %v571
    %v579 = vmul.f32 %v447, %v572
    %v580 = vmul.f32 %v455, %v573
    %v581 = vmul.f32 %v463, %v569
    %v582 = vmul.f32 %v471, %v571
    %v583 = vmul.f32 %v479, %v572
    %v584 = vmul.f32 %v487, %v573
    %v585 = vmul.f32 %v495, %v569
    %v586 = vmul.f32 %v503, %v571
    %v587 = vmul.f32 %v511, %v572
    %v588 = vmul.f32 %v519, %v573
    %v589 = vmul.f32 %v527, %v569
    %v590 = vmul.f32 %v535, %v571
    %v591 = vmul.f32 %v543, %v572
    %v592 = vmul.f32 %v551, %v573
    %v593 = vmul.f32 %v559, %v569
    %v594 = vmul.f32 %v567, %v571
    %v595 = vadd.f32 %v404, %v577
    %v596 = vadd.f32 %v405, %v578
    %v597 = vadd.f32 %v406, %v579
    %v598 = vadd.f32 %v407, %v580
    %v599 = vadd.f32 %v408, %v581
    %v600 = vadd.f32 %v409, %v582
    %v601 = vadd.f32 %v410, %v583
    %v602 = vadd.f32 %v411, %v584
    %v603 = vadd.f32 %v412, %v585
    %v604 = vadd.f32 %v413, %v586
    %v605 = vadd.f32 %v414, %v587
    %v606 = vadd.f32 %v415, %v588
    %v607 = vadd.f32 %v416, %v589
    %v608 = vadd.f32 %v417, %v590
    %v609 = vadd.f32 %v418, %v591
    %v610 = vadd.f32 %v419, %v592
    %v611 = vadd.f32 %v420, %v593
    %v612 = vadd.f32 %v421, %v594
    %s613 = sadd.s32 %s15, 1
    %s614 = scalar_lea.vmem %s0, %s613
    %v615 = vld [vmem:[%s614] sm:$0x3f]
    %v616 = vld [vmem:[%s614 + $0x8] sm:$0x3f]
    %v617 = vld [vmem:[%s614 + $0x10] sm:$0x3f]
    %v618 = vld [vmem:[%s614 + $0x18] sm:$0x3f]
    %v619 = vld [vmem:[%s614 + $0x20] sm:$0x3f]
    %v620 = vld [vmem:[%s614 + $0x28] sm:$0x3f]
    %v627 = vrot.slane %v615, 2
    %v628 = vrot.slane %v615, 4
    %v629 = vrot.slane %v616, 2
    %v630 = vrot.slane %v616, 4
    %v631 = vrot.slane %v617, 2
    %v632 = vrot.slane %v617, 4
    %v633 = vrot.slane %v618, 2
    %v634 = vrot.slane %v618, 4
    %v635 = vrot.slane %v619, 2
    %v636 = vrot.slane %v619, 4
    %v637 = vrot.slane %v620, 2
    %v638 = vrot.slane %v620, 4
    %s639 = scalar_lea.vmem %s1, 3
    %v640 = vld [vmem:[%s639] sm:$0x1]
    %641 = vset.pattern.permute.xlu0 0
    %642 = vperm.xlu0 %641, %v615
    %v643 = vpop.permute.xlu0 %642
    %v646 = vunpack.c.l.s4 269488144
    %v647 = vunpack.c.0.s8 %v646
    %v648 = vperm.slane %v643, %v647
    %649 = vset.pattern.permute.xlu0 0
    %650 = vperm.xlu0 %649, %v627
    %v651 = vpop.permute.xlu0 %650
    %v654 = vunpack.c.l.s4 269488144
    %v655 = vunpack.c.0.s8 %v654
    %v656 = vperm.slane %v651, %v655
    %657 = vset.pattern.permute.xlu0 0
    %658 = vperm.xlu0 %657, %v628
    %v659 = vpop.permute.xlu0 %658
    %v662 = vunpack.c.l.s4 269488144
    %v663 = vunpack.c.0.s8 %v662
    %v664 = vperm.slane %v659, %v663
    %665 = vset.pattern.permute.xlu0 0
    %666 = vperm.xlu0 %665, %v616
    %v667 = vpop.permute.xlu0 %666
    %v670 = vunpack.c.l.s4 269488144
    %v671 = vunpack.c.0.s8 %v670
    %v672 = vperm.slane %v667, %v671
    %673 = vset.pattern.permute.xlu0 0
    %674 = vperm.xlu0 %673, %v629
    %v675 = vpop.permute.xlu0 %674
    %v678 = vunpack.c.l.s4 269488144
    %v679 = vunpack.c.0.s8 %v678
    %v680 = vperm.slane %v675, %v679
    %681 = vset.pattern.permute.xlu0 0
    %682 = vperm.xlu0 %681, %v630
    %v683 = vpop.permute.xlu0 %682
    %v686 = vunpack.c.l.s4 269488144
    %v687 = vunpack.c.0.s8 %v686
    %v688 = vperm.slane %v683, %v687
    %689 = vset.pattern.permute.xlu0 0
    %690 = vperm.xlu0 %689, %v617
    %v691 = vpop.permute.xlu0 %690
    %v694 = vunpack.c.l.s4 269488144
    %v695 = vunpack.c.0.s8 %v694
    %v696 = vperm.slane %v691, %v695
    %697 = vset.pattern.permute.xlu0 0
    %698 = vperm.xlu0 %697, %v631
    %v699 = vpop.permute.xlu0 %698
    %v702 = vunpack.c.l.s4 269488144
    %v703 = vunpack.c.0.s8 %v702
    %v704 = vperm.slane %v699, %v703
    %705 = vset.pattern.permute.xlu0 0
    %706 = vperm.xlu0 %705, %v632
    %v707 = vpop.permute.xlu0 %706
    %v710 = vunpack.c.l.s4 269488144
    %v711 = vunpack.c.0.s8 %v710
    %v712 = vperm.slane %v707, %v711
    %713 = vset.pattern.permute.xlu0 0
    %714 = vperm.xlu0 %713, %v618
    %v715 = vpop.permute.xlu0 %714
    %v718 = vunpack.c.l.s4 269488144
    %v719 = vunpack.c.0.s8 %v718
    %v720 = vperm.slane %v715, %v719
    %721 = vset.pattern.permute.xlu0 0
    %722 = vperm.xlu0 %721, %v633
    %v723 = vpop.permute.xlu0 %722
    %v726 = vunpack.c.l.s4 269488144
    %v727 = vunpack.c.0.s8 %v726
    %v728 = vperm.slane %v723, %v727
    %729 = vset.pattern.permute.xlu0 0
    %730 = vperm.xlu0 %729, %v634
    %v731 = vpop.permute.xlu0 %730
    %v734 = vunpack.c.l.s4 269488144
    %v735 = vunpack.c.0.s8 %v734
    %v736 = vperm.slane %v731, %v735
    %737 = vset.pattern.permute.xlu0 0
    %738 = vperm.xlu0 %737, %v619
    %v739 = vpop.permute.xlu0 %738
    %v742 = vunpack.c.l.s4 269488144
    %v743 = vunpack.c.0.s8 %v742
    %v744 = vperm.slane %v739, %v743
    %745 = vset.pattern.permute.xlu0 0
    %746 = vperm.xlu0 %745, %v635
    %v747 = vpop.permute.xlu0 %746
    %v750 = vunpack.c.l.s4 269488144
    %v751 = vunpack.c.0.s8 %v750
    %v752 = vperm.slane %v747, %v751
    %753 = vset.pattern.permute.xlu0 0
    %754 = vperm.xlu0 %753, %v636
    %v755 = vpop.permute.xlu0 %754
    %v758 = vunpack.c.l.s4 269488144
    %v759 = vunpack.c.0.s8 %v758
    %v760 = vperm.slane %v755, %v759
    %761 = vset.pattern.permute.xlu0 0
    %762 = vperm.xlu0 %761, %v620
    %v763 = vpop.permute.xlu0 %762
    %v766 = vunpack.c.l.s4 269488144
    %v767 = vunpack.c.0.s8 %v766
    %v768 = vperm.slane %v763, %v767
    %769 = vset.pattern.permute.xlu0 0
    %770 = vperm.xlu0 %769, %v637
    %v771 = vpop.permute.xlu0 %770
    %v774 = vunpack.c.l.s4 269488144
    %v775 = vunpack.c.0.s8 %v774
    %v776 = vperm.slane %v771, %v775
    %777 = vset.pattern.permute.xlu0 0
    %778 = vperm.xlu0 %777, %v638
    %v779 = vpop.permute.xlu0 %778
    %v782 = vunpack.c.l.s4 269488144
    %v783 = vunpack.c.0.s8 %v782
    %v784 = vperm.slane %v779, %v783
    %v786 = vperm.slane %v640, 0
    %v788 = vrot.slane %v786, 2
    %v789 = vrot.slane %v786, 4
    %v790 = vrot.slane %v786, 6
    %v794 = vmul.f32 %v648, %v786
    %v795 = vmul.f32 %v656, %v788
    %v796 = vmul.f32 %v664, %v789
    %v797 = vmul.f32 %v672, %v790
    %v798 = vmul.f32 %v680, %v786
    %v799 = vmul.f32 %v688, %v788
    %v800 = vmul.f32 %v696, %v789
    %v801 = vmul.f32 %v704, %v790
    %v802 = vmul.f32 %v712, %v786
    %v803 = vmul.f32 %v720, %v788
    %v804 = vmul.f32 %v728, %v789
    %v805 = vmul.f32 %v736, %v790
    %v806 = vmul.f32 %v744, %v786
    %v807 = vmul.f32 %v752, %v788
    %v808 = vmul.f32 %v760, %v789
    %v809 = vmul.f32 %v768, %v790
    %v810 = vmul.f32 %v776, %v786
    %v811 = vmul.f32 %v784, %v788
    %v812 = vadd.f32 %v595, %v794
    %v813 = vadd.f32 %v596, %v795
    %v814 = vadd.f32 %v597, %v796
    %v815 = vadd.f32 %v598, %v797
    %v816 = vadd.f32 %v599, %v798
    %v817 = vadd.f32 %v600, %v799
    %v818 = vadd.f32 %v601, %v800
    %v819 = vadd.f32 %v602, %v801
    %v820 = vadd.f32 %v603, %v802
    %v821 = vadd.f32 %v604, %v803
    %v822 = vadd.f32 %v605, %v804
    %v823 = vadd.f32 %v606, %v805
    %v824 = vadd.f32 %v607, %v806
    %v825 = vadd.f32 %v608, %v807
    %v826 = vadd.f32 %v609, %v808
    %v827 = vadd.f32 %v610, %v809
    %v828 = vadd.f32 %v611, %v810
    %v829 = vadd.f32 %v612, %v811
    %s830 = scalar_lea.vmem %s1, 4
    %v831 = vld [vmem:[%s830] sm:$0x1]
    %832 = vset.pattern.permute.xlu0 1
    %833 = vperm.xlu0 %832, %v615
    %v834 = vpop.permute.xlu0 %833
    %v837 = vunpack.c.l.s4 269488144
    %v838 = vunpack.c.0.s8 %v837
    %v839 = vperm.slane %v834, %v838
    %840 = vset.pattern.permute.xlu0 1
    %841 = vperm.xlu0 %840, %v627
    %v842 = vpop.permute.xlu0 %841
    %v845 = vunpack.c.l.s4 269488144
    %v846 = vunpack.c.0.s8 %v845
    %v847 = vperm.slane %v842, %v846
    %848 = vset.pattern.permute.xlu0 1
    %849 = vperm.xlu0 %848, %v628
    %v850 = vpop.permute.xlu0 %849
    %v853 = vunpack.c.l.s4 269488144
    %v854 = vunpack.c.0.s8 %v853
    %v855 = vperm.slane %v850, %v854
    %856 = vset.pattern.permute.xlu0 1
    %857 = vperm.xlu0 %856, %v616
    %v858 = vpop.permute.xlu0 %857
    %v861 = vunpack.c.l.s4 269488144
    %v862 = vunpack.c.0.s8 %v861
    %v863 = vperm.slane %v858, %v862
    %864 = vset.pattern.permute.xlu0 1
    %865 = vperm.xlu0 %864, %v629
    %v866 = vpop.permute.xlu0 %865
    %v869 = vunpack.c.l.s4 269488144
    %v870 = vunpack.c.0.s8 %v869
    %v871 = vperm.slane %v866, %v870
    %872 = vset.pattern.permute.xlu0 1
    %873 = vperm.xlu0 %872, %v630
    %v874 = vpop.permute.xlu0 %873
    %v877 = vunpack.c.l.s4 269488144
    %v878 = vunpack.c.0.s8 %v877
    %v879 = vperm.slane %v874, %v878
    %880 = vset.pattern.permute.xlu0 1
    %881 = vperm.xlu0 %880, %v617
    %v882 = vpop.permute.xlu0 %881
    %v885 = vunpack.c.l.s4 269488144
    %v886 = vunpack.c.0.s8 %v885
    %v887 = vperm.slane %v882, %v886
    %888 = vset.pattern.permute.xlu0 1
    %889 = vperm.xlu0 %888, %v631
    %v890 = vpop.permute.xlu0 %889
    %v893 = vunpack.c.l.s4 269488144
    %v894 = vunpack.c.0.s8 %v893
    %v895 = vperm.slane %v890, %v894
    %896 = vset.pattern.permute.xlu0 1
    %897 = vperm.xlu0 %896, %v632
    %v898 = vpop.permute.xlu0 %897
    %v901 = vunpack.c.l.s4 269488144
    %v902 = vunpack.c.0.s8 %v901
    %v903 = vperm.slane %v898, %v902
    %904 = vset.pattern.permute.xlu0 1
    %905 = vperm.xlu0 %904, %v618
    %v906 = vpop.permute.xlu0 %905
    %v909 = vunpack.c.l.s4 269488144
    %v910 = vunpack.c.0.s8 %v909
    %v911 = vperm.slane %v906, %v910
    %912 = vset.pattern.permute.xlu0 1
    %913 = vperm.xlu0 %912, %v633
    %v914 = vpop.permute.xlu0 %913
    %v917 = vunpack.c.l.s4 269488144
    %v918 = vunpack.c.0.s8 %v917
    %v919 = vperm.slane %v914, %v918
    %920 = vset.pattern.permute.xlu0 1
    %921 = vperm.xlu0 %920, %v634
    %v922 = vpop.permute.xlu0 %921
    %v925 = vunpack.c.l.s4 269488144
    %v926 = vunpack.c.0.s8 %v925
    %v927 = vperm.slane %v922, %v926
    %928 = vset.pattern.permute.xlu0 1
    %929 = vperm.xlu0 %928, %v619
    %v930 = vpop.permute.xlu0 %929
    %v933 = vunpack.c.l.s4 269488144
    %v934 = vunpack.c.0.s8 %v933
    %v935 = vperm.slane %v930, %v934
    %936 = vset.pattern.permute.xlu0 1
    %937 = vperm.xlu0 %936, %v635
    %v938 = vpop.permute.xlu0 %937
    %v941 = vunpack.c.l.s4 269488144
    %v942 = vunpack.c.0.s8 %v941
    %v943 = vperm.slane %v938, %v942
    %944 = vset.pattern.permute.xlu0 1
    %945 = vperm.xlu0 %944, %v636
    %v946 = vpop.permute.xlu0 %945
    %v949 = vunpack.c.l.s4 269488144
    %v950 = vunpack.c.0.s8 %v949
    %v951 = vperm.slane %v946, %v950
    %952 = vset.pattern.permute.xlu0 1
    %953 = vperm.xlu0 %952, %v620
    %v954 = vpop.permute.xlu0 %953
    %v957 = vunpack.c.l.s4 269488144
    %v958 = vunpack.c.0.s8 %v957
    %v959 = vperm.slane %v954, %v958
    %960 = vset.pattern.permute.xlu0 1
    %961 = vperm.xlu0 %960, %v637
    %v962 = vpop.permute.xlu0 %961
    %v965 = vunpack.c.l.s4 269488144
    %v966 = vunpack.c.0.s8 %v965
    %v967 = vperm.slane %v962, %v966
    %968 = vset.pattern.permute.xlu0 1
    %969 = vperm.xlu0 %968, %v638
    %v970 = vpop.permute.xlu0 %969
    %v973 = vunpack.c.l.s4 269488144
    %v974 = vunpack.c.0.s8 %v973
    %v975 = vperm.slane %v970, %v974
    %v977 = vperm.slane %v831, 0
    %v979 = vrot.slane %v977, 2
    %v980 = vrot.slane %v977, 4
    %v981 = vrot.slane %v977, 6
    %v985 = vmul.f32 %v839, %v977
    %v986 = vmul.f32 %v847, %v979
    %v987 = vmul.f32 %v855, %v980
    %v988 = vmul.f32 %v863, %v981
    %v989 = vmul.f32 %v871, %v977
    %v990 = vmul.f32 %v879, %v979
    %v991 = vmul.f32 %v887, %v980
    %v992 = vmul.f32 %v895, %v981
    %v993 = vmul.f32 %v903, %v977
    %v994 = vmul.f32 %v911, %v979
    %v995 = vmul.f32 %v919, %v980
    %v996 = vmul.f32 %v927, %v981
    %v997 = vmul.f32 %v935, %v977
    %v998 = vmul.f32 %v943, %v979
    %v999 = vmul.f32 %v951, %v980
    %v1000 = vmul.f32 %v959, %v981
    %v1001 = vmul.f32 %v967, %v977
    %v1002 = vmul.f32 %v975, %v979
    %v1003 = vadd.f32 %v812, %v985
    %v1004 = vadd.f32 %v813, %v986
    %v1005 = vadd.f32 %v814, %v987
    %v1006 = vadd.f32 %v815, %v988
    %v1007 = vadd.f32 %v816, %v989
    %v1008 = vadd.f32 %v817, %v990
    %v1009 = vadd.f32 %v818, %v991
    %v1010 = vadd.f32 %v819, %v992
    %v1011 = vadd.f32 %v820, %v993
    %v1012 = vadd.f32 %v821, %v994
    %v1013 = vadd.f32 %v822, %v995
    %v1014 = vadd.f32 %v823, %v996
    %v1015 = vadd.f32 %v824, %v997
    %v1016 = vadd.f32 %v825, %v998
    %v1017 = vadd.f32 %v826, %v999
    %v1018 = vadd.f32 %v827, %v1000
    %v1019 = vadd.f32 %v828, %v1001
    %v1020 = vadd.f32 %v829, %v1002
    %v1021 = vld [vmem:[%s2] sm:$0x1]
    %v1023 = vperm.slane %v1021, 0
    %v1025 = vrot.slane %v1023, 2
    %v1026 = vrot.slane %v1023, 4
    %v1027 = vrot.slane %v1023, 6
    %v1031 = vadd.f32 %v1003, %v1023
    %v1032 = vadd.f32 %v1004, %v1025
    %v1033 = vadd.f32 %v1005, %v1026
    %v1034 = vadd.f32 %v1006, %v1027
    %v1035 = vadd.f32 %v1007, %v1023
    %v1036 = vadd.f32 %v1008, %v1025
    %v1037 = vadd.f32 %v1009, %v1026
    %v1038 = vadd.f32 %v1010, %v1027
    %v1039 = vadd.f32 %v1011, %v1023
    %v1040 = vadd.f32 %v1012, %v1025
    %v1041 = vadd.f32 %v1013, %v1026
    %v1042 = vadd.f32 %v1014, %v1027
    %v1043 = vadd.f32 %v1015, %v1023
    %v1044 = vadd.f32 %v1016, %v1025
    %v1045 = vadd.f32 %v1017, %v1026
    %v1046 = vadd.f32 %v1018, %v1027
    %v1047 = vadd.f32 %v1019, %v1023
    %v1048 = vadd.f32 %v1020, %v1025
    %vm1049 = vcmp.ge.f32.partialorder %v1031, 0.0
    %vm1050 = vcmp.ge.f32.partialorder %v1032, 0.0
    %vm1051 = vcmp.ge.f32.partialorder %v1033, 0.0
    %vm1052 = vcmp.ge.f32.partialorder %v1034, 0.0
    %vm1053 = vcmp.ge.f32.partialorder %v1035, 0.0
    %vm1054 = vcmp.ge.f32.partialorder %v1036, 0.0
    %vm1055 = vcmp.ge.f32.partialorder %v1037, 0.0
    %vm1056 = vcmp.ge.f32.partialorder %v1038, 0.0
    %vm1057 = vcmp.ge.f32.partialorder %v1039, 0.0
    %vm1058 = vcmp.ge.f32.partialorder %v1040, 0.0
    %vm1059 = vcmp.ge.f32.partialorder %v1041, 0.0
    %vm1060 = vcmp.ge.f32.partialorder %v1042, 0.0
    %vm1061 = vcmp.ge.f32.partialorder %v1043, 0.0
    %vm1062 = vcmp.ge.f32.partialorder %v1044, 0.0
    %vm1063 = vcmp.ge.f32.partialorder %v1045, 0.0
    %vm1064 = vcmp.ge.f32.partialorder %v1046, 0.0
    %vm1065 = vcmp.ge.f32.partialorder %v1047, 0.0
    %vm1066 = vcmp.ge.f32.partialorder %v1048, 0.0
    %v1067 = vmul.f32 %v1031, 0.1
    %v1068 = vmul.f32 %v1032, 0.1
    %v1069 = vmul.f32 %v1033, 0.1
    %v1070 = vmul.f32 %v1034, 0.1
    %v1071 = vmul.f32 %v1035, 0.1
    %v1072 = vmul.f32 %v1036, 0.1
    %v1073 = vmul.f32 %v1037, 0.1
    %v1074 = vmul.f32 %v1038, 0.1
    %v1075 = vmul.f32 %v1039, 0.1
    %v1076 = vmul.f32 %v1040, 0.1
    %v1077 = vmul.f32 %v1041, 0.1
    %v1078 = vmul.f32 %v1042, 0.1
    %v1079 = vmul.f32 %v1043, 0.1
    %v1080 = vmul.f32 %v1044, 0.1
    %v1081 = vmul.f32 %v1045, 0.1
    %v1082 = vmul.f32 %v1046, 0.1
    %v1083 = vmul.f32 %v1047, 0.1
    %v1084 = vmul.f32 %v1048, 0.1
    %v1085 = vsel %vm1049, %v1031, %v1067
    %v1086 = vsel %vm1050, %v1032, %v1068
    %v1087 = vsel %vm1051, %v1033, %v1069
    %v1088 = vsel %vm1052, %v1034, %v1070
    %v1089 = vsel %vm1053, %v1035, %v1071
    %v1090 = vsel %vm1054, %v1036, %v1072
    %v1091 = vsel %vm1055, %v1037, %v1073
    %v1092 = vsel %vm1056, %v1038, %v1074
    %v1093 = vsel %vm1057, %v1039, %v1075
    %v1094 = vsel %vm1058, %v1040, %v1076
    %v1095 = vsel %vm1059, %v1041, %v1077
    %v1096 = vsel %vm1060, %v1042, %v1078
    %v1097 = vsel %vm1061, %v1043, %v1079
    %v1098 = vsel %vm1062, %v1044, %v1080
    %v1099 = vsel %vm1063, %v1045, %v1081
    %v1100 = vsel %vm1064, %v1046, %v1082
    %v1101 = vsel %vm1065, %v1047, %v1083
    %v1102 = vsel %vm1066, %v1048, %v1084
    %1121 = vst [vmem:[#allocation1] ss:$4 sm:$0xff] %v1085
    %s1122 = scalar_lea.vmem [#allocation1], 1
    %1123 = vst [vmem:[%s1122] ss:$4 sm:$0xff] %v1086
    %s1124 = scalar_lea.vmem [#allocation1], 2
    %1125 = vst [vmem:[%s1124] ss:$4 sm:$0xff] %v1087
    %v1126 = vld.sshfl [vmem:[#allocation1] sm:$0xff pattern:$0x73625140]
    %s1127 = scalar_lea.vmem [#allocation1], 32
    %1128 = vst [vmem:[%s1127] ss:$4 sm:$0xff] %v1088
    %s1129 = scalar_lea.vmem [#allocation1], 33
    %1130 = vst [vmem:[%s1129] ss:$4 sm:$0xff] %v1089
    %s1131 = scalar_lea.vmem [#allocation1], 34
    %1132 = vst [vmem:[%s1131] ss:$4 sm:$0xff] %v1090
    %v1133 = vld.sshfl [vmem:[#allocation1 + $0x20] sm:$0xff pattern:$0x73625140]
    %1134 = vst [vmem:[#allocation1] ss:$4 sm:$0xff] %v1091
    %1135 = vst [vmem:[%s1122] ss:$4 sm:$0xff] %v1092
    %1136 = vst [vmem:[%s1124] ss:$4 sm:$0xff] %v1093
    %v1137 = vld.sshfl [vmem:[#allocation1] sm:$0xff pattern:$0x73625140]
    %1138 = vst [vmem:[%s1127] ss:$4 sm:$0xff] %v1094
    %1139 = vst [vmem:[%s1129] ss:$4 sm:$0xff] %v1095
    %1140 = vst [vmem:[%s1131] ss:$4 sm:$0xff] %v1096
    %v1141 = vld.sshfl [vmem:[#allocation1 + $0x20] sm:$0xff pattern:$0x73625140]
    %1142 = vst [vmem:[#allocation1] ss:$4 sm:$0xff] %v1097
    %1143 = vst [vmem:[%s1122] ss:$4 sm:$0xff] %v1098
    %1144 = vst [vmem:[%s1124] ss:$4 sm:$0xff] %v1099
    %v1145 = vld.sshfl [vmem:[#allocation1] sm:$0xff pattern:$0x73625140]
    %1146 = vst [vmem:[%s1127] ss:$4 sm:$0xff] %v1100
    %1147 = vst [vmem:[%s1129] ss:$4 sm:$0xff] %v1101
    %1148 = vst [vmem:[%s1131] ss:$4 sm:$0xff] %v1102
    %v1149 = vld.sshfl [vmem:[#allocation1 + $0x20] sm:$0xff pattern:$0x73625140]
    %vm1156 = vcmask 259072
    %1157 = vst.msk [vmem:[#allocation2] sm:$0x3f] %vm1156, %v1126
    %1158 = vst.msk [vmem:[#allocation2 + $0x8] sm:$0x3f] %vm1156, %v1133
    %1159 = vst.msk [vmem:[#allocation2 + $0x10] sm:$0x3f] %vm1156, %v1137
    %1160 = vst.msk [vmem:[#allocation2 + $0x18] sm:$0x3f] %vm1156, %v1141
    %1161 = vst.msk [vmem:[#allocation2 + $0x20] sm:$0x3f] %vm1156, %v1145
    %1162 = vst.msk [vmem:[#allocation2 + $0x28] sm:$0x3f] %vm1156, %v1149
    // Predicated region
    $region14: #{tpu_custom_call.1} parent=1 // pred_check
      _
    $region15: #{tpu_custom_call.1} parent=1 // pred_check_branch
      %1164 = sbr.rel (0) target = $region17
    $region16: #{tpu_custom_call.1} parent=1 // pred_region
      %1166 = vsyncadd [#allocation3], 0
      %s1167 = sshll.u32 [#allocation2], 4
      %s1168 = int_to_ptr.vmem [resolvable:$true] %s1167
      %s1169 = sshll.u32 %s3, 4
      %s1170 = int_to_ptr.hbm [resolvable:$true] %s1169
      %1175 = dma.vmem_to_hbm [thread:$0]  %s1168, 768, %s1170, [#allocation3], 128, 128, 8
    $region17: #{tpu_custom_call.1} parent=1 // pred_fallthru
      _
    // Predicated region
    $region18: #{tpu_custom_call.1} parent=1 // pred_check
      _
    $region19: #{tpu_custom_call.1} parent=1 // pred_check_branch
      %1177 = sbr.rel (0) target = $region21
    $region20: #{tpu_custom_call.1} parent=1 // pred_region
      %1179 = dma.done [#allocation3], 768
    $region21: #{tpu_custom_call.1} parent=1 // pred_fallthru
      _
    %1180 = vsyncpa [#allocation3], 1

</llo_original>
